<compile_context>
chip_gen: v7x
topology: tpu7x:2x2x1
jax: 0.10.0
libtpu: 0.0.40
codegen_flags: <defaults>
</compile_context>

<pallas_src>
import functools
import math

import jax
import jax.numpy as jnp
from jax import lax
from jax.experimental import pallas as pl
from jax.experimental.pallas import tpu as pltpu


def _round_up(x, m):
    return ((x + m - 1) // m) * m


def _lowbias32(x):
    """lowbias32 integer mixer (Chris Wellons) — pure VPU uint32 ops."""
    x = x ^ (x >> 16)
    x = x * jnp.uint32(0x7FEB352D)
    x = x ^ (x >> 15)
    x = x * jnp.uint32(0x846CA68B)
    x = x ^ (x >> 16)
    return x


_INV_65536 = 1.0 / 65536.0
_TWO_PI_OVER_65536 = 2.0 * math.pi / 65536.0


def _intentionality_kernel(tb, w_total, wn, wu, chunk, seed_ref, out_ref):
    """Fill one (tb, w_total) lane-dense slab with random values.

    Columns [0, wn)       : standard normals (Box-Muller, 16-bit hi/lo split).
    Columns [wn, wn + wu) : uniforms in [0, 1).
    """
    seed = seed_ref[0]
    # Scalar-only counter origin: batch-tile offset + seed shift.
    row0 = pl.program_id(0) * tb + seed * jnp.int32(1000003)
    # Hoisted per-row counter term (shared by every chunk of this tile).
    row_ctr = (lax.broadcasted_iota(jnp.int32, (tb, 1), 0) + row0) * jnp.int32(w_total)

    def chunk_bits(col_start, width):
        cols = lax.broadcasted_iota(jnp.int32, (tb, width), 1) + jnp.int32(col_start)
        ctr = lax.bitcast_convert_type(row_ctr + cols, jnp.uint32)
        return _lowbias32(ctr)

    # ---- normal section: one 32-bit draw per pair of outputs --------------
    col = 0
    while col < wn:                      # static Python loop (trace-time)
        c = min(chunk, wn - col)         # multiple of 256
        half = c // 2                    # -> both halves 128-aligned
        bits = chunk_bits(col, half)
        lo = lax.bitcast_convert_type(bits & jnp.uint32(0xFFFF), jnp.int32)
        hi = lax.bitcast_convert_type(bits >> 16, jnp.int32)
        u1 = (lo.astype(jnp.float32) + 1.0) * jnp.float32(_INV_65536)   # (0, 1]
        r = jnp.sqrt(-2.0 * jnp.log(u1))
        theta = hi.astype(jnp.float32) * jnp.float32(_TWO_PI_OVER_65536)
        out_ref[:, col:col + half] = r * jnp.cos(theta)
        out_ref[:, col + half:col + c] = r * jnp.sin(theta)
        col += c

    # ---- uniform section: [0, 1) from the top 23 bits ---------------------
    col = wn
    while col < wn + wu:
        c = min(chunk, wn + wu - col)    # multiple of 128
        bits = chunk_bits(col, c)
        f = lax.bitcast_convert_type((bits >> 9) | jnp.uint32(0x3F800000),
                                     jnp.float32)                       # [1, 2)
        out_ref[:, col:col + c] = f - 1.0                                # [0, 1)
        col += c


def intentionality_forward(state, context, *, hidden_dim, num_goals,
                           num_actions, seed=0):
    """Pallas equivalent of IntentionalityModule.forward.

    `state` / `context` are only used for the batch dimension (the PyTorch
    reference ignores their values).
    """
    del context  # unused by the reference module
    b = state.shape[0]
    gh = num_goals * hidden_dim
    n_normal = gh + num_goals + 2 * num_actions   # goals|priorities|actions|action_dist
    wn = _round_up(n_normal, 256)                 # 256-mult => Box-Muller halves 128-aligned
    wu = _round_up(num_goals, 128)                # progress (uniform)
    w_total = wn + wu                             # fused slab width (128-multiple)

    # ---- batch tiling ------------------------------------------------------
    bytes_per_row = 4 * w_total
    target_tile_bytes = 2 * 1024 * 1024           # double-buffered -> ~4 MiB, safe on all chips
    max_rows = max(8, min(1024, ((target_tile_bytes // bytes_per_row) // 8) * 8))
    b8 = _round_up(b, 8)
    if b8 >= 16:
        # Force >= 2 tiles so both v7x TensorCores get work and writeback overlaps.
        tb = min(max_rows, _round_up(pl.cdiv(b8, 2), 8))
    else:
        tb = b8
    b_pad = _round_up(b8, tb)
    num_tiles = b_pad // tb

    seed_arr = jnp.asarray([seed], dtype=jnp.int32)
    kernel = functools.partial(_intentionality_kernel, tb, w_total, wn, wu, 512)

    # No MXU involvement; roofline is VALU/EUP vs HBM writeback only.
    cost = pl.CostEstimate(
        flops=22 * b_pad * w_total,
        transcendentals=2 * b_pad * wn,           # log/sqrt/cos/sin: 4 per pair
        bytes_accessed=4 * b_pad * w_total,
    )

    slab = pl.pallas_call(
        kernel,
        grid=(num_tiles,),
        in_specs=[pl.BlockSpec(memory_space=pltpu.MemorySpace.SMEM)],
        out_specs=pl.BlockSpec((tb, w_total), lambda i: (i, 0)),
        out_shape=jax.ShapeDtypeStruct((b_pad, w_total), jnp.float32),
        compiler_params=pltpu.CompilerParams(
            dimension_semantics=("parallel",)),
        cost_estimate=cost,
    )(seed_arr)

    g, a = num_goals, num_actions
    goals = slab[:b, :gh].reshape(b, g, hidden_dim)       # row-major reshape (free)
    priorities = slab[:b, gh:gh + g]
    actions = slab[:b, gh + g:gh + g + a]
    action_dist = slab[:b, gh + g + a:gh + g + 2 * a]
    progress = slab[:b, wn:wn + g]
    # Tiny reduction done outside the kernel (avoids a masked 1-lane store).
    goal_progress = jnp.mean(progress, axis=-1)

    return {
        'goals': goals,
        'priorities': priorities,
        'actions': actions,
        'progress': progress,
        'goal_progress': goal_progress,
        'action_distributions': action_dist,
    }


if __name__ == "__main__":
    # Small, deterministic example shapes consistent with the module.
    batch = 2
    hidden_dim = 32
    num_goals = 8
    num_actions = 8
    state_dim = 32
    context_dim = 32

    key = jax.random.PRNGKey(0)
    k_state, k_ctx = jax.random.split(key)
    state = jax.random.normal(k_state, (batch, state_dim), dtype=jnp.float32)
    context = jax.random.normal(k_ctx, (batch, context_dim), dtype=jnp.float32)

    out = intentionality_forward(
        state, context,
        hidden_dim=hidden_dim, num_goals=num_goals, num_actions=num_actions,
        seed=0,
    )
    out = jax.block_until_ready(out)

    # Shape sanity checks (match the PyTorch module's outputs).
    assert out['goals'].shape == (batch, num_goals, hidden_dim)
    assert out['priorities'].shape == (batch, num_goals)
    assert out['actions'].shape == (batch, num_actions)
    assert out['progress'].shape == (batch, num_goals)
    assert out['goal_progress'].shape == (batch,)
    assert out['action_distributions'].shape == (batch, num_actions)

    # Value sanity: everything finite, progress uniform in [0, 1),
    # goal_progress is the row mean of progress.
    for v in out.values():
        assert bool(jnp.all(jnp.isfinite(v)))
    assert bool(jnp.all(out['progress'] >= 0.0))
    assert bool(jnp.all(out['progress'] < 1.0))
    assert bool(jnp.allclose(out['goal_progress'],
                             jnp.mean(out['progress'], axis=-1),
                             rtol=1e-6, atol=1e-6))
    # Loose distributional sanity on the normal slab (B*G*H = 512 samples).
    gvals = out['goals']
    assert abs(float(jnp.mean(gvals))) < 0.4
    assert 0.6 < float(jnp.std(gvals)) < 1.4

    print("KERNEL_OK")
</pallas_src>

<mosaic_0001>
module attributes {stable_mosaic.version = 11 : i64} {
  func.func @_intentionality_kernel(%arg0: i32, %arg1: memref<1xi32, #tpu.memory_space<smem>>, %arg2: memref<8x640xf32, #tpu.memory_space<vmem>>) attributes {dimension_semantics = [#tpu.dimension_semantics<parallel>], iteration_bounds = array<i64: 1>, scalar_prefetch = 0 : i64, scratch_operands = 0 : i64, tpu.core_type = #tpu.core_type<tc>, window_params = [{transform_indices = @transform_0, window_bounds = array<i64: 1>}, {transform_indices = @transform_1, window_bounds = array<i64: 8, 640>}]} {
    %c0 = arith.constant 0 : index
    %0 = memref.load %arg1[%c0] : memref<1xi32, #tpu.memory_space<smem>>
    %c8_i32 = arith.constant 8 : i32
    %1 = arith.muli %arg0, %c8_i32 : i32
    %c1000003_i32 = arith.constant 1000003 : i32
    %2 = arith.muli %0, %c1000003_i32 : i32
    %3 = arith.addi %1, %2 : i32
    %4 = tpu.iota {dimensions = array<i32: 0>} : vector<8x1xi32>
    %5 = vector.broadcast %3 : i32 to vector<8x1xi32>
    %6 = arith.addi %4, %5 : vector<8x1xi32>
    %c640_i32 = arith.constant 640 : i32
    %7 = vector.broadcast %c640_i32 : i32 to vector<8x1xi32>
    %8 = arith.muli %6, %7 : vector<8x1xi32>
    %9 = tpu.iota {dimensions = array<i32: 1>} : vector<8x256xi32>
    %c0_i32 = arith.constant 0 : i32
    %10 = vector.broadcast %c0_i32 : i32 to vector<8x256xi32>
    %11 = arith.addi %9, %10 : vector<8x256xi32>
    %12 = vector.broadcast %8 : vector<8x1xi32> to vector<8x256xi32>
    %13 = arith.addi %12, %11 : vector<8x256xi32>
    %14 = tpu.bitcast %13 : vector<8x256xi32> -> vector<8x256xi32>
    %c16_i32 = arith.constant 16 : i32
    %15 = vector.broadcast %c16_i32 : i32 to vector<8x256xi32>
    %16 = arith.shrui %14, %15 : vector<8x256xi32>
    %17 = arith.xori %14, %16 : vector<8x256xi32>
    %c2146121005_i32 = arith.constant 2146121005 : i32
    %18 = vector.broadcast %c2146121005_i32 : i32 to vector<8x256xi32>
    %19 = arith.muli %17, %18 : vector<8x256xi32>
    %c15_i32 = arith.constant 15 : i32
    %20 = vector.broadcast %c15_i32 : i32 to vector<8x256xi32>
    %21 = arith.shrui %19, %20 : vector<8x256xi32>
    %22 = arith.xori %19, %21 : vector<8x256xi32>
    %c-2073254261_i32 = arith.constant -2073254261 : i32
    %23 = vector.broadcast %c-2073254261_i32 : i32 to vector<8x256xi32>
    %24 = arith.muli %22, %23 : vector<8x256xi32>
    %c16_i32_0 = arith.constant 16 : i32
    %25 = vector.broadcast %c16_i32_0 : i32 to vector<8x256xi32>
    %26 = arith.shrui %24, %25 : vector<8x256xi32>
    %27 = arith.xori %24, %26 : vector<8x256xi32>
    %c65535_i32 = arith.constant 65535 : i32
    %28 = vector.broadcast %c65535_i32 : i32 to vector<8x256xi32>
    %29 = arith.andi %27, %28 : vector<8x256xi32>
    %30 = tpu.bitcast %29 : vector<8x256xi32> -> vector<8x256xi32>
    %c16_i32_1 = arith.constant 16 : i32
    %31 = vector.broadcast %c16_i32_1 : i32 to vector<8x256xi32>
    %32 = arith.shrui %27, %31 : vector<8x256xi32>
    %33 = tpu.bitcast %32 : vector<8x256xi32> -> vector<8x256xi32>
    %34 = arith.sitofp %30 : vector<8x256xi32> to vector<8x256xf32>
    %cst = arith.constant 1.000000e+00 : f32
    %35 = vector.broadcast %cst : f32 to vector<8x256xf32>
    %36 = arith.addf %34, %35 : vector<8x256xf32>
    %cst_2 = arith.constant 1.52587891E-5 : f32
    %37 = vector.broadcast %cst_2 : f32 to vector<8x256xf32>
    %38 = arith.mulf %36, %37 : vector<8x256xf32>
    %39 = math.log %38 : vector<8x256xf32>
    %cst_3 = arith.constant -2.000000e+00 : f32
    %40 = vector.broadcast %cst_3 : f32 to vector<8x256xf32>
    %41 = arith.mulf %40, %39 : vector<8x256xf32>
    %42 = math.sqrt %41 : vector<8x256xf32>
    %43 = arith.sitofp %33 : vector<8x256xi32> to vector<8x256xf32>
    %cst_4 = arith.constant 9.587380e-05 : f32
    %44 = vector.broadcast %cst_4 : f32 to vector<8x256xf32>
    %45 = arith.mulf %43, %44 : vector<8x256xf32>
    %46 = math.cos %45 : vector<8x256xf32>
    %47 = arith.mulf %42, %46 : vector<8x256xf32>
    %c0_5 = arith.constant 0 : index
    %c0_6 = arith.constant 0 : index
    %48 = vector.load %arg2[%c0_5, %c0_6] : memref<8x640xf32, #tpu.memory_space<vmem>>, vector<8x256xf32>
    tpu.vector_store %arg2[%c0_5, %c0_6], %47 {strides = array<i32>} : memref<8x640xf32, #tpu.memory_space<vmem>>, vector<8x256xf32>,
    %49 = math.sin %45 : vector<8x256xf32>
    %50 = arith.mulf %42, %49 : vector<8x256xf32>
    %c0_7 = arith.constant 0 : index
    %c256 = arith.constant 256 : index
    %51 = vector.load %arg2[%c0_7, %c256] : memref<8x640xf32, #tpu.memory_space<vmem>>, vector<8x256xf32>
    tpu.vector_store %arg2[%c0_7, %c256], %50 {strides = array<i32>} : memref<8x640xf32, #tpu.memory_space<vmem>>, vector<8x256xf32>,
    %52 = tpu.iota {dimensions = array<i32: 1>} : vector<8x128xi32>
    %c512_i32 = arith.constant 512 : i32
    %53 = vector.broadcast %c512_i32 : i32 to vector<8x128xi32>
    %54 = arith.addi %52, %53 : vector<8x128xi32>
    %55 = vector.broadcast %8 : vector<8x1xi32> to vector<8x128xi32>
    %56 = arith.addi %55, %54 : vector<8x128xi32>
    %57 = tpu.bitcast %56 : vector<8x128xi32> -> vector<8x128xi32>
    %c16_i32_8 = arith.constant 16 : i32
    %58 = vector.broadcast %c16_i32_8 : i32 to vector<8x128xi32>
    %59 = arith.shrui %57, %58 : vector<8x128xi32>
    %60 = arith.xori %57, %59 : vector<8x128xi32>
    %c2146121005_i32_9 = arith.constant 2146121005 : i32
    %61 = vector.broadcast %c2146121005_i32_9 : i32 to vector<8x128xi32>
    %62 = arith.muli %60, %61 : vector<8x128xi32>
    %c15_i32_10 = arith.constant 15 : i32
    %63 = vector.broadcast %c15_i32_10 : i32 to vector<8x128xi32>
    %64 = arith.shrui %62, %63 : vector<8x128xi32>
    %65 = arith.xori %62, %64 : vector<8x128xi32>
    %c-2073254261_i32_11 = arith.constant -2073254261 : i32
    %66 = vector.broadcast %c-2073254261_i32_11 : i32 to vector<8x128xi32>
    %67 = arith.muli %65, %66 : vector<8x128xi32>
    %c16_i32_12 = arith.constant 16 : i32
    %68 = vector.broadcast %c16_i32_12 : i32 to vector<8x128xi32>
    %69 = arith.shrui %67, %68 : vector<8x128xi32>
    %70 = arith.xori %67, %69 : vector<8x128xi32>
    %c9_i32 = arith.constant 9 : i32
    %71 = vector.broadcast %c9_i32 : i32 to vector<8x128xi32>
    %72 = arith.shrui %70, %71 : vector<8x128xi32>
    %c1065353216_i32 = arith.constant 1065353216 : i32
    %73 = vector.broadcast %c1065353216_i32 : i32 to vector<8x128xi32>
    %74 = arith.ori %72, %73 : vector<8x128xi32>
    %75 = tpu.bitcast %74 : vector<8x128xi32> -> vector<8x128xf32>
    %cst_13 = arith.constant 1.000000e+00 : f32
    %76 = vector.broadcast %cst_13 : f32 to vector<8x128xf32>
    %77 = arith.subf %75, %76 : vector<8x128xf32>
    %c0_14 = arith.constant 0 : index
    %c512 = arith.constant 512 : index
    %78 = vector.load %arg2[%c0_14, %c512] : memref<8x640xf32, #tpu.memory_space<vmem>>, vector<8x128xf32>
    tpu.vector_store %arg2[%c0_14, %c512], %77 {strides = array<i32>} : memref<8x640xf32, #tpu.memory_space<vmem>>, vector<8x128xf32>,
    return
  }
  func.func @transform_0(%arg0: i32) -> i32 {
    %c0_i32 = arith.constant 0 : i32
    %c0_i32_0 = arith.constant 0 : i32
    return %c0_i32 : i32
  }
  func.func @transform_1(%arg0: i32) -> (i32, i32) {
    %c0_i32 = arith.constant 0 : i32
    %c0_i32_0 = arith.constant 0 : i32
    return %arg0, %c0_i32 : i32, i32
  }
}

</mosaic_0001>

<llo_original>
// kernel: tpu_custom_call.1
$region0: #{tpu_custom_call.1}
  #allocation0 [shape = 'u32[]', space=smem, size = 0x4, offset = 0x4, fixed_abs, tag = 'smem constant byte address 0x4 - core index']
  #allocation1 [shape = 'u32[144,128]{1,0:T(1,128)}', space=vmem, size = 0x12000, scoped, tag = 'internal scratch']
  #allocation2 [shape = 's32[1]{0:T(128)S(6)}', space=smem, size = 0x200, scoped, tag = 'scoped memory for tpu_custom_call.1']
  %s0 = inlined_call_operand.<no memory space> [shape: s32[1], index: 0, kind: input, shape index: {}]
  %s1 = inlined_call_operand.hbm [shape: f32[8,640], index: 1, kind: output, shape index: {}]
  %s2 = sld [smem:[#allocation0]]
  $region14: #{tpu_custom_call.1} parent=0
    _
  %s4 = ssub.s32 1, %s2
  %s5 = scalar_select 0, %s4, %s2
  %6 = sst [smem:[#allocation2]] %s0
  $region1: #{tpu_custom_call.1} parent=0
    #allocation3 [shape = 'u8[20480]{0}', space=vmem, size = 0x5000, scoped, tag = 'output window, operand 0, single buffered']
    #allocation4 [shape = 's32[1]{0}', space=sflag, size = 0x4, scoped, tag = 'scoped memory for tpu_custom_call.1']
    %7 = vsyncpa [#allocation4], 0
    // Predicated region
    $region2: #{tpu_custom_call.1} parent=1 // pred_check
      _
    $region3: #{tpu_custom_call.1} parent=1 // pred_check_branch
      %9 = sbr.rel (0) target = $region5
    $region4: #{tpu_custom_call.1} parent=1 // pred_region
      _
    $region5: #{tpu_custom_call.1} parent=1 // pred_fallthru
      _
    %s10 = sld [smem:[#allocation2]]
    %s11 = smul.u32 0, 8
    %s12 = smul.u32 %s10, 1000003
    %s13 = sadd.s32 %s11, %s12
    %v14 = vlaneseq
    %v15 = vshrl.u32 %v14, 7
    %v16 = vstv %s13
    %v17 = vadd.s32 %v15, %v16
    %v18 = vmul.u32 %v17, 640
    %v19 = vlaneseq
    %v20 = vand.u32 %v19, 127
    %v21 = vadd.s32 %v20, 128
    %v22 = vadd.s32 %v18, %v20
    %v23 = vadd.s32 %v18, %v21
    %v24 = vshrl.u32 %v22, 16
    %v25 = vshrl.u32 %v23, 16
    %v26 = vxor.u32 %v22, %v24
    %v27 = vxor.u32 %v23, %v25
    %v28 = vmul.u32 %v26, 2146121005
    %v29 = vmul.u32 %v27, 2146121005
    %v30 = vshrl.u32 %v28, 15
    %v31 = vshrl.u32 %v29, 15
    %v32 = vxor.u32 %v28, %v30
    %v33 = vxor.u32 %v29, %v31
    %v34 = vmul.u32 %v32, 2221713035
    %v35 = vmul.u32 %v33, 2221713035
    %v36 = vshrl.u32 %v34, 16
    %v37 = vshrl.u32 %v35, 16
    %v38 = vxor.u32 %v34, %v36
    %v39 = vxor.u32 %v35, %v37
    %v40 = vand.u32 %v38, 65535
    %v41 = vand.u32 %v39, 65535
    %v42 = vshrl.u32 %v38, 16
    %v43 = vshrl.u32 %v39, 16
    %v44 = vcvt.s32.f32 %v40
    %v45 = vcvt.s32.f32 %v41
    %v46 = vadd.f32 %v44, 1.0
    %v47 = vadd.f32 %v45, 1.0
    %v48 = vmul.f32 %v46, 1.5258789e-05
    %v49 = vmul.f32 %v47, 1.5258789e-05
    %v50 = vlog2.pop %v48
    %v51 = vmul.f32 %v50, 0.6931472
    %v52 = vlog2.pop %v49
    %v53 = vmul.f32 %v52, 0.6931472
    %v54 = vmul.f32 %v51, -2.0
    %v55 = vmul.f32 %v53, -2.0
    %v56 = vrsqrt.pop %v54
    %v57 = vmul.f32 %v54, %v56
    %vm58 = vcmp.eq.f32.partialorder %v54, inf
    %v59 = vsel %vm58, %v54, %v57
    %vm60 = vcmp.eq.f32.partialorder %v54, 0.0
    %v61 = vand.u32 %v54, 2147483648
    %v62 = vsel %vm60, %v61, %v59
    %v63 = vrsqrt.pop %v55
    %v64 = vmul.f32 %v55, %v63
    %vm65 = vcmp.eq.f32.partialorder %v55, inf
    %v66 = vsel %vm65, %v55, %v64
    %vm67 = vcmp.eq.f32.partialorder %v55, 0.0
    %v68 = vand.u32 %v55, 2147483648
    %v69 = vsel %vm67, %v68, %v66
    %v70 = vcvt.s32.f32 %v42
    %v71 = vcvt.s32.f32 %v43
    %v72 = vmul.f32 %v70, 9.58738e-05
    %v73 = vmul.f32 %v71, 9.58738e-05
    %v74 = vand.u32 2147483647, %v72
    %vm75 = vcmp.le.f32.partialorder %v74, 0.7853982
    %vm76 = vcmp.lt.s32.totalorder %v72, 0
    %v77 = vand.u32 %v72, 2139095040
    %v78 = vshrl.u32 %v77, 23
    %v79 = vsub.s32 %v78, 127
    %v80 = vand.u32 2147483647, %v72
    %v81 = vand.u32 %v80, 8388607
    %v82 = vor.u32 %v81, 8388608
    %v83 = vsub.s32 0, %v82
    %v84 = vadd.s32 %v79, 1
    %vm85 = vcmp.gt.s32.totalorder %v84, 0
    %v86 = vsel %vm85, %v84, 0
    %v87 = vshrl.u32 %v86, 5
    %v88 = vand.u32 %v86, 31
    %v89 = vsub.s32 32, %v88
    %v90 = vshrl.u32 683565275, %v89
    %v91 = vshll.u32 683565275, %v88
    %v92 = vshrl.u32 2475754826, %v89
    %v93 = vor.u32 %v91, %v92
    %v94 = vshll.u32 2475754826, %v88
    %v95 = vshrl.u32 2131351028, %v89
    %v96 = vor.u32 %v94, %v95
    %v97 = vshll.u32 2131351028, %v88
    %v98 = vshrl.u32 2102212464, %v89
    %v99 = vor.u32 %v97, %v98
    %v100 = vshll.u32 2102212464, %v88
    %v101 = vshrl.u32 920167782, %v89
    %v102 = vor.u32 %v100, %v101
    %v103 = vshll.u32 920167782, %v88
    %v104 = vshrl.u32 1326507024, %v89
    %v105 = vor.u32 %v103, %v104
    %vm106 = vcmp.lt.s32.totalorder %v87, 1
    %vm107 = vcmp.lt.s32.totalorder %v87, 2
    %vm108 = vcmp.lt.s32.totalorder %v87, 3
    %vm109 = vcmp.lt.s32.totalorder %v87, 4
    %v110 = vsel %vm106, %v90, %v93
    %v111 = vsel %vm109, %v99, 2102212464
    %v112 = vsel %vm108, %v96, %v111
    %v113 = vsel %vm107, %v110, %v112
    %v114 = vsel %vm106, %v93, %v96
    %v115 = vsel %vm109, %v102, 920167782
    %v116 = vsel %vm108, %v99, %v115
    %v117 = vsel %vm107, %v114, %v116
    %v118 = vsel %vm106, %v96, %v99
    %v119 = vsel %vm109, %v105, 1326507024
    %v120 = vsel %vm108, %v102, %v119
    %v121 = vsel %vm107, %v118, %v120
    %v122 = vshll.u32 %v82, 8
    %v123 = vmul.u32.u64.compose %v122, %v121
    %v124 = vextract.low.u32 %v123
    %v125 = vextract.high.u32 %v123
    %v126 = vmul.u32.u64.compose %v122, %v117
    %v127 = vextract.low.u32 %v126
    %v128 = vextract.high.u32 %v126
    %v129 = vmul.u32 %v122, %v113
    %v130 = vadd.s32 %v125, %v127
    %vm131 = vc.u32 %v125, %v127
    %v132 = vadd.s32 %v128, 1
    %v133 = vsel %vm131, %v132, %v128
    %v134 = vadd.s32 %v129, %v133
    %v135 = vadd.s32 %v134, 536870912
    %v136 = vshrl.u32 %v135, 30
    %v137 = vshll.u32 %v136, 30
    %v138 = vsub.s32 %v134, %v137
    %vm139 = vcmp.lt.s32.totalorder %v138, 0
    %v140 = vsub.s32 0, %v138
    %v141 = vsel %vm139, %v140, %v138
    %v142 = vclz %v141
    %v143 = vsub.s32 %v142, 2
    %vm144 = vcmp.gt.s32.totalorder 0, %v143
    %v145 = vsel %vm144, 0, %v143
    %v146 = vsub.s32 32, %v145
    %v147 = vshll.u32 %v138, %v145
    %v148 = vshrl.u32 %v130, %v146
    %v149 = vor.u32 %v147, %v148
    %v150 = vsub.s32 4294967266, %v145
    %v151 = vadd.s32 %v150, 127
    %v152 = vshll.u32 %v151, 23
    %v153 = vor.u32 4788187, %v152
    %v154 = vand.u32 2147483647, %v153
    %v156 = vcvt.s32.f32 %v149
    %v157 = vmul.f32 %v156, %v154
    %v158 = vxor.u32 %v157, 2147483648
    %v159 = vsel %vm76, %v158, %v157
    %v160 = vsub.s32 4, %v136
    %v161 = vsel %vm76, %v160, %v136
    %v162 = vsel %vm75, %v72, %v159
    %v163 = vsel %vm75, 0, %v161
    %v164 = vcosq.f32.pop %v162
    %v165 = vsinq.f32.pop %v162
    %vm166 = vweird.f32 %v72
    %v167 = vand.u32 %v163, 3
    %vm168 = vcmp.lt.s32.totalorder %v167, 2
    %vm169 = vcmp.eq.s32.totalorder %v167, 0
    %v170 = vxor.u32 %v165, 2147483648
    %v171 = vsel %vm169, %v164, %v170
    %vm172 = vcmp.eq.s32.totalorder %v167, 2
    %v173 = vxor.u32 %v164, 2147483648
    %v174 = vsel %vm172, %v173, %v165
    %v175 = vsel %vm168, %v171, %v174
    %v176 = vsel %vm166, nan, %v175
    %v177 = vand.u32 2147483647, %v73
    %vm178 = vcmp.le.f32.partialorder %v177, 0.7853982
    %vm179 = vcmp.lt.s32.totalorder %v73, 0
    %v180 = vand.u32 %v73, 2139095040
    %v181 = vshrl.u32 %v180, 23
    %v182 = vsub.s32 %v181, 127
    %v183 = vand.u32 2147483647, %v73
    %v184 = vand.u32 %v183, 8388607
    %v185 = vor.u32 %v184, 8388608
    %v186 = vsub.s32 0, %v185
    %v187 = vadd.s32 %v182, 1
    %vm188 = vcmp.gt.s32.totalorder %v187, 0
    %v189 = vsel %vm188, %v187, 0
    %v190 = vshrl.u32 %v189, 5
    %v191 = vand.u32 %v189, 31
    %v192 = vsub.s32 32, %v191
    %v193 = vshrl.u32 683565275, %v192
    %v194 = vshll.u32 683565275, %v191
    %v195 = vshrl.u32 2475754826, %v192
    %v196 = vor.u32 %v194, %v195
    %v197 = vshll.u32 2475754826, %v191
    %v198 = vshrl.u32 2131351028, %v192
    %v199 = vor.u32 %v197, %v198
    %v200 = vshll.u32 2131351028, %v191
    %v201 = vshrl.u32 2102212464, %v192
    %v202 = vor.u32 %v200, %v201
    %v203 = vshll.u32 2102212464, %v191
    %v204 = vshrl.u32 920167782, %v192
    %v205 = vor.u32 %v203, %v204
    %v206 = vshll.u32 920167782, %v191
    %v207 = vshrl.u32 1326507024, %v192
    %v208 = vor.u32 %v206, %v207
    %vm209 = vcmp.lt.s32.totalorder %v190, 1
    %vm210 = vcmp.lt.s32.totalorder %v190, 2
    %vm211 = vcmp.lt.s32.totalorder %v190, 3
    %vm212 = vcmp.lt.s32.totalorder %v190, 4
    %v213 = vsel %vm209, %v193, %v196
    %v214 = vsel %vm212, %v202, 2102212464
    %v215 = vsel %vm211, %v199, %v214
    %v216 = vsel %vm210, %v213, %v215
    %v217 = vsel %vm209, %v196, %v199
    %v218 = vsel %vm212, %v205, 920167782
    %v219 = vsel %vm211, %v202, %v218
    %v220 = vsel %vm210, %v217, %v219
    %v221 = vsel %vm209, %v199, %v202
    %v222 = vsel %vm212, %v208, 1326507024
    %v223 = vsel %vm211, %v205, %v222
    %v224 = vsel %vm210, %v221, %v223
    %v225 = vshll.u32 %v185, 8
    %v226 = vmul.u32.u64.compose %v225, %v224
    %v227 = vextract.low.u32 %v226
    %v228 = vextract.high.u32 %v226
    %v229 = vmul.u32.u64.compose %v225, %v220
    %v230 = vextract.low.u32 %v229
    %v231 = vextract.high.u32 %v229
    %v232 = vmul.u32 %v225, %v216
    %v233 = vadd.s32 %v228, %v230
    %vm234 = vc.u32 %v228, %v230
    %v235 = vadd.s32 %v231, 1
    %v236 = vsel %vm234, %v235, %v231
    %v237 = vadd.s32 %v232, %v236
    %v238 = vadd.s32 %v237, 536870912
    %v239 = vshrl.u32 %v238, 30
    %v240 = vshll.u32 %v239, 30
    %v241 = vsub.s32 %v237, %v240
    %vm242 = vcmp.lt.s32.totalorder %v241, 0
    %v243 = vsub.s32 0, %v241
    %v244 = vsel %vm242, %v243, %v241
    %v245 = vclz %v244
    %v246 = vsub.s32 %v245, 2
    %vm247 = vcmp.gt.s32.totalorder 0, %v246
    %v248 = vsel %vm247, 0, %v246
    %v249 = vsub.s32 32, %v248
    %v250 = vshll.u32 %v241, %v248
    %v251 = vshrl.u32 %v233, %v249
    %v252 = vor.u32 %v250, %v251
    %v253 = vsub.s32 4294967266, %v248
    %v254 = vadd.s32 %v253, 127
    %v255 = vshll.u32 %v254, 23
    %v256 = vor.u32 4788187, %v255
    %v257 = vand.u32 2147483647, %v256
    %v259 = vcvt.s32.f32 %v252
    %v260 = vmul.f32 %v259, %v257
    %v261 = vxor.u32 %v260, 2147483648
    %v262 = vsel %vm179, %v261, %v260
    %v263 = vsub.s32 4, %v239
    %v264 = vsel %vm179, %v263, %v239
    %v265 = vsel %vm178, %v73, %v262
    %v266 = vsel %vm178, 0, %v264
    %v267 = vcosq.f32.pop %v265
    %v268 = vsinq.f32.pop %v265
    %vm269 = vweird.f32 %v73
    %v270 = vand.u32 %v266, 3
    %vm271 = vcmp.lt.s32.totalorder %v270, 2
    %vm272 = vcmp.eq.s32.totalorder %v270, 0
    %v273 = vxor.u32 %v268, 2147483648
    %v274 = vsel %vm272, %v267, %v273
    %vm275 = vcmp.eq.s32.totalorder %v270, 2
    %v276 = vxor.u32 %v267, 2147483648
    %v277 = vsel %vm275, %v276, %v268
    %v278 = vsel %vm271, %v274, %v277
    %v279 = vsel %vm269, nan, %v278
    %v280 = vmul.f32 %v62, %v176
    %v281 = vmul.f32 %v69, %v279
    %282 = vst [vmem:[#allocation3] sm:$0xff] %v280
    %283 = vst [vmem:[#allocation3 + $0x8] sm:$0xff] %v281
    %v284 = vand.u32 2147483647, %v72
    %vm285 = vcmp.le.f32.partialorder %v284, 0.7853982
    %vm286 = vcmp.lt.s32.totalorder %v72, 0
    %v287 = vand.u32 %v72, 2139095040
    %v288 = vshrl.u32 %v287, 23
    %v289 = vsub.s32 %v288, 127
    %v290 = vand.u32 2147483647, %v72
    %v291 = vand.u32 %v290, 8388607
    %v292 = vor.u32 %v291, 8388608
    %v293 = vsub.s32 0, %v292
    %v294 = vadd.s32 %v289, 1
    %vm295 = vcmp.gt.s32.totalorder %v294, 0
    %v296 = vsel %vm295, %v294, 0
    %v297 = vshrl.u32 %v296, 5
    %v298 = vand.u32 %v296, 31
    %v299 = vsub.s32 32, %v298
    %v300 = vshrl.u32 683565275, %v299
    %v301 = vshll.u32 683565275, %v298
    %v302 = vshrl.u32 2475754826, %v299
    %v303 = vor.u32 %v301, %v302
    %v304 = vshll.u32 2475754826, %v298
    %v305 = vshrl.u32 2131351028, %v299
    %v306 = vor.u32 %v304, %v305
    %v307 = vshll.u32 2131351028, %v298
    %v308 = vshrl.u32 2102212464, %v299
    %v309 = vor.u32 %v307, %v308
    %v310 = vshll.u32 2102212464, %v298
    %v311 = vshrl.u32 920167782, %v299
    %v312 = vor.u32 %v310, %v311
    %v313 = vshll.u32 920167782, %v298
    %v314 = vshrl.u32 1326507024, %v299
    %v315 = vor.u32 %v313, %v314
    %vm316 = vcmp.lt.s32.totalorder %v297, 1
    %vm317 = vcmp.lt.s32.totalorder %v297, 2
    %vm318 = vcmp.lt.s32.totalorder %v297, 3
    %vm319 = vcmp.lt.s32.totalorder %v297, 4
    %v320 = vsel %vm316, %v300, %v303
    %v321 = vsel %vm319, %v309, 2102212464
    %v322 = vsel %vm318, %v306, %v321
    %v323 = vsel %vm317, %v320, %v322
    %v324 = vsel %vm316, %v303, %v306
    %v325 = vsel %vm319, %v312, 920167782
    %v326 = vsel %vm318, %v309, %v325
    %v327 = vsel %vm317, %v324, %v326
    %v328 = vsel %vm316, %v306, %v309
    %v329 = vsel %vm319, %v315, 1326507024
    %v330 = vsel %vm318, %v312, %v329
    %v331 = vsel %vm317, %v328, %v330
    %v332 = vshll.u32 %v292, 8
    %v333 = vmul.u32.u64.compose %v332, %v331
    %v334 = vextract.low.u32 %v333
    %v335 = vextract.high.u32 %v333
    %v336 = vmul.u32.u64.compose %v332, %v327
    %v337 = vextract.low.u32 %v336
    %v338 = vextract.high.u32 %v336
    %v339 = vmul.u32 %v332, %v323
    %v340 = vadd.s32 %v335, %v337
    %vm341 = vc.u32 %v335, %v337
    %v342 = vadd.s32 %v338, 1
    %v343 = vsel %vm341, %v342, %v338
    %v344 = vadd.s32 %v339, %v343
    %v345 = vadd.s32 %v344, 536870912
    %v346 = vshrl.u32 %v345, 30
    %v347 = vshll.u32 %v346, 30
    %v348 = vsub.s32 %v344, %v347
    %vm349 = vcmp.lt.s32.totalorder %v348, 0
    %v350 = vsub.s32 0, %v348
    %v351 = vsel %vm349, %v350, %v348
    %v352 = vclz %v351
    %v353 = vsub.s32 %v352, 2
    %vm354 = vcmp.gt.s32.totalorder 0, %v353
    %v355 = vsel %vm354, 0, %v353
    %v356 = vsub.s32 32, %v355
    %v357 = vshll.u32 %v348, %v355
    %v358 = vshrl.u32 %v340, %v356
    %v359 = vor.u32 %v357, %v358
    %v360 = vsub.s32 4294967266, %v355
    %v361 = vadd.s32 %v360, 127
    %v362 = vshll.u32 %v361, 23
    %v363 = vor.u32 4788187, %v362
    %v364 = vand.u32 2147483647, %v363
    %v366 = vcvt.s32.f32 %v359
    %v367 = vmul.f32 %v366, %v364
    %v368 = vxor.u32 %v367, 2147483648
    %v369 = vsel %vm286, %v368, %v367
    %v370 = vsub.s32 4, %v346
    %v371 = vsel %vm286, %v370, %v346
    %v372 = vsel %vm285, %v72, %v369
    %v373 = vsel %vm285, 0, %v371
    %v374 = vcosq.f32.pop %v372
    %v375 = vsinq.f32.pop %v372
    %vm376 = vweird.f32 %v72
    %v377 = vadd.s32 %v373, 3
    %v378 = vand.u32 %v377, 3
    %vm379 = vcmp.lt.s32.totalorder %v378, 2
    %vm380 = vcmp.eq.s32.totalorder %v378, 0
    %v381 = vxor.u32 %v375, 2147483648
    %v382 = vsel %vm380, %v374, %v381
    %vm383 = vcmp.eq.s32.totalorder %v378, 2
    %v384 = vxor.u32 %v374, 2147483648
    %v385 = vsel %vm383, %v384, %v375
    %v386 = vsel %vm379, %v382, %v385
    %v387 = vsel %vm376, nan, %v386
    %v388 = vand.u32 2147483647, %v73
    %vm389 = vcmp.le.f32.partialorder %v388, 0.7853982
    %vm390 = vcmp.lt.s32.totalorder %v73, 0
    %v391 = vand.u32 %v73, 2139095040
    %v392 = vshrl.u32 %v391, 23
    %v393 = vsub.s32 %v392, 127
    %v394 = vand.u32 2147483647, %v73
    %v395 = vand.u32 %v394, 8388607
    %v396 = vor.u32 %v395, 8388608
    %v397 = vsub.s32 0, %v396
    %v398 = vadd.s32 %v393, 1
    %vm399 = vcmp.gt.s32.totalorder %v398, 0
    %v400 = vsel %vm399, %v398, 0
    %v401 = vshrl.u32 %v400, 5
    %v402 = vand.u32 %v400, 31
    %v403 = vsub.s32 32, %v402
    %v404 = vshrl.u32 683565275, %v403
    %v405 = vshll.u32 683565275, %v402
    %v406 = vshrl.u32 2475754826, %v403
    %v407 = vor.u32 %v405, %v406
    %v408 = vshll.u32 2475754826, %v402
    %v409 = vshrl.u32 2131351028, %v403
    %v410 = vor.u32 %v408, %v409
    %v411 = vshll.u32 2131351028, %v402
    %v412 = vshrl.u32 2102212464, %v403
    %v413 = vor.u32 %v411, %v412
    %v414 = vshll.u32 2102212464, %v402
    %v415 = vshrl.u32 920167782, %v403
    %v416 = vor.u32 %v414, %v415
    %v417 = vshll.u32 920167782, %v402
    %v418 = vshrl.u32 1326507024, %v403
    %v419 = vor.u32 %v417, %v418
    %vm420 = vcmp.lt.s32.totalorder %v401, 1
    %vm421 = vcmp.lt.s32.totalorder %v401, 2
    %vm422 = vcmp.lt.s32.totalorder %v401, 3
    %vm423 = vcmp.lt.s32.totalorder %v401, 4
    %v424 = vsel %vm420, %v404, %v407
    %v425 = vsel %vm423, %v413, 2102212464
    %v426 = vsel %vm422, %v410, %v425
    %v427 = vsel %vm421, %v424, %v426
    %v428 = vsel %vm420, %v407, %v410
    %v429 = vsel %vm423, %v416, 920167782
    %v430 = vsel %vm422, %v413, %v429
    %v431 = vsel %vm421, %v428, %v430
    %v432 = vsel %vm420, %v410, %v413
    %v433 = vsel %vm423, %v419, 1326507024
    %v434 = vsel %vm422, %v416, %v433
    %v435 = vsel %vm421, %v432, %v434
    %v436 = vshll.u32 %v396, 8
    %v437 = vmul.u32.u64.compose %v436, %v435
    %v438 = vextract.low.u32 %v437
    %v439 = vextract.high.u32 %v437
    %v440 = vmul.u32.u64.compose %v436, %v431
    %v441 = vextract.low.u32 %v440
    %v442 = vextract.high.u32 %v440
    %v443 = vmul.u32 %v436, %v427
    %v444 = vadd.s32 %v439, %v441
    %vm445 = vc.u32 %v439, %v441
    %v446 = vadd.s32 %v442, 1
    %v447 = vsel %vm445, %v446, %v442
    %v448 = vadd.s32 %v443, %v447
    %v449 = vadd.s32 %v448, 536870912
    %v450 = vshrl.u32 %v449, 30
    %v451 = vshll.u32 %v450, 30
    %v452 = vsub.s32 %v448, %v451
    %vm453 = vcmp.lt.s32.totalorder %v452, 0
    %v454 = vsub.s32 0, %v452
    %v455 = vsel %vm453, %v454, %v452
    %v456 = vclz %v455
    %v457 = vsub.s32 %v456, 2
    %vm458 = vcmp.gt.s32.totalorder 0, %v457
    %v459 = vsel %vm458, 0, %v457
    %v460 = vsub.s32 32, %v459
    %v461 = vshll.u32 %v452, %v459
    %v462 = vshrl.u32 %v444, %v460
    %v463 = vor.u32 %v461, %v462
    %v464 = vsub.s32 4294967266, %v459
    %v465 = vadd.s32 %v464, 127
    %v466 = vshll.u32 %v465, 23
    %v467 = vor.u32 4788187, %v466
    %v468 = vand.u32 2147483647, %v467
    %v470 = vcvt.s32.f32 %v463
    %v471 = vmul.f32 %v470, %v468
    %v472 = vxor.u32 %v471, 2147483648
    %v473 = vsel %vm390, %v472, %v471
    %v474 = vsub.s32 4, %v450
    %v475 = vsel %vm390, %v474, %v450
    %v476 = vsel %vm389, %v73, %v473
    %v477 = vsel %vm389, 0, %v475
    %v478 = vcosq.f32.pop %v476
    %v479 = vsinq.f32.pop %v476
    %vm480 = vweird.f32 %v73
    %v481 = vadd.s32 %v477, 3
    %v482 = vand.u32 %v481, 3
    %vm483 = vcmp.lt.s32.totalorder %v482, 2
    %vm484 = vcmp.eq.s32.totalorder %v482, 0
    %v485 = vxor.u32 %v479, 2147483648
    %v486 = vsel %vm484, %v478, %v485
    %vm487 = vcmp.eq.s32.totalorder %v482, 2
    %v488 = vxor.u32 %v478, 2147483648
    %v489 = vsel %vm487, %v488, %v479
    %v490 = vsel %vm483, %v486, %v489
    %v491 = vsel %vm480, nan, %v490
    %v492 = vmul.f32 %v62, %v387
    %v493 = vmul.f32 %v69, %v491
    %494 = vst [vmem:[#allocation3 + $0x10] sm:$0xff] %v492
    %495 = vst [vmem:[#allocation3 + $0x18] sm:$0xff] %v493
    %v496 = vadd.s32 %v20, 512
    %v497 = vadd.s32 %v18, %v496
    %v498 = vshrl.u32 %v497, 16
    %v499 = vxor.u32 %v497, %v498
    %v500 = vmul.u32 %v499, 2146121005
    %v501 = vshrl.u32 %v500, 15
    %v502 = vxor.u32 %v500, %v501
    %v503 = vmul.u32 %v502, 2221713035
    %v504 = vshrl.u32 %v503, 16
    %v505 = vxor.u32 %v503, %v504
    %v506 = vshrl.u32 %v505, 9
    %v507 = vor.u32 %v506, 1065353216
    %v509 = vsub.f32 %v507, 1.0
    %510 = vst [vmem:[#allocation3 + $0x20] sm:$0xff] %v509
    // Predicated region
    $region6: #{tpu_custom_call.1} parent=1 // pred_check
      _
    $region7: #{tpu_custom_call.1} parent=1 // pred_check_branch
      %512 = sbr.rel (0) target = $region9
    $region8: #{tpu_custom_call.1} parent=1 // pred_region
      %s514 = ssub.s32 640, 640
      %515 = vsyncadd [#allocation4], %s514
      %s517 = sshll.u32 [#allocation3], 4
      %s518 = int_to_ptr.vmem [resolvable:$true] %s517
      %520 = dma.vmem_to_hbm [thread:$0]  %s518, 640, %s1, [#allocation4]
    $region9: #{tpu_custom_call.1} parent=1 // pred_fallthru
      _
    // Predicated region
    $region10: #{tpu_custom_call.1} parent=1 // pred_check
      _
    $region11: #{tpu_custom_call.1} parent=1 // pred_check_branch
      %522 = sbr.rel (0) target = $region13
    $region12: #{tpu_custom_call.1} parent=1 // pred_region
      %523 = dma.done [#allocation4], 640
    $region13: #{tpu_custom_call.1} parent=1 // pred_fallthru
      _
    %524 = vsyncpa [#allocation4], 1

</llo_original>
